<compile_context>
chip_gen: v5e
topology: v5e:2x2
jax: 0.10.0
libtpu: 0.0.40
codegen_flags: <defaults>
</compile_context>

<pallas_src>
import functools

import jax
import jax.numpy as jnp
from jax.experimental import pallas as pl
from jax.experimental.pallas import tpu as pltpu

_LANE = 128
_VMEM_LIMIT_BYTES = 48 * 1024 * 1024   # fits v5e/v6e (128 MiB) and v7x (64 MiB)
_FUSE_VMEM_BUDGET = 40 * 1024 * 1024   # use the fused single-kernel path below this


def _round_up(n, m):
    return ((n + m - 1) // m) * m


def _pad_to(a, shape):
    pads = [(0, t - s) for s, t in zip(a.shape, shape)]
    return jnp.pad(a, pads)


# --------------------------------------------------------------------------
# Fused whole-network kernel: everything resident in VMEM, single grid step.
# --------------------------------------------------------------------------
def _fused_gcn_kernel(*refs, nmid):
    if nmid > 0:
        adj_ref, w1_ref, wmid_ref, w2_ref, out_ref = refs
    else:
        adj_ref, w1_ref, w2_ref, out_ref = refs
        wmid_ref = None
    cd = adj_ref.dtype  # operand (MXU feed) dtype; accumulation is always f32

    adj = adj_ref[...]
    # layer1 (featureless): pre_sup == W1, h = relu(adj @ W1)
    h = jnp.maximum(
        jnp.dot(adj, w1_ref[...], preferred_element_type=jnp.float32), 0.0)
    # middle GraphConvolutions: h = relu(adj @ (h @ Wmid_l))
    for l in range(nmid):
        pre = jnp.dot(h.astype(cd), wmid_ref[l],
                      preferred_element_type=jnp.float32)
        h = jnp.maximum(
            jnp.dot(adj, pre.astype(cd), preferred_element_type=jnp.float32),
            0.0)
    # layer2 (no activation): out = adj @ (h @ W2)
    pre = jnp.dot(h.astype(cd), w2_ref[...], preferred_element_type=jnp.float32)
    out_ref[...] = jnp.dot(
        adj, pre.astype(cd), preferred_element_type=jnp.float32
    ).astype(out_ref.dtype)


def _full_block_spec(a):
    nd = a.ndim
    return pl.BlockSpec(tuple(a.shape), lambda i, _nd=nd: (0,) * _nd)


def _fused_forward(adj_p, w1_p, wmid_p, w2_p):
    np_, cp = adj_p.shape[0], w2_p.shape[1]
    nmid = 0 if wmid_p is None else wmid_p.shape[0]
    inputs = [adj_p, w1_p] + ([wmid_p] if nmid else []) + [w2_p]
    return pl.pallas_call(
        functools.partial(_fused_gcn_kernel, nmid=nmid),
        out_shape=jax.ShapeDtypeStruct((np_, cp), jnp.float32),
        grid_spec=pltpu.PrefetchScalarGridSpec(
            num_scalar_prefetch=0,
            grid=(1,),
            in_specs=[_full_block_spec(a) for a in inputs],
            out_specs=pl.BlockSpec((np_, cp), lambda i: (0, 0)),
        ),
        compiler_params=pltpu.CompilerParams(
            dimension_semantics=("arbitrary",),
            vmem_limit_bytes=_VMEM_LIMIT_BYTES,
        ),
    )(*inputs)


def _fused_vmem_bytes(np_, hp, cp, nmid, operand_itemsize):
    weights = np_ * np_ + np_ * hp + nmid * hp * hp + hp * cp
    io = 2 * weights * operand_itemsize + 2 * np_ * cp * 4  # pessimistic 2x buffering
    temps = 3 * np_ * max(hp, cp) * 4                       # h / pre_sup temporaries
    return io + temps


# --------------------------------------------------------------------------
# Fallback: K-tiled matmul kernel with f32 accumulator (large-graph path).
# --------------------------------------------------------------------------
def _matmul_kernel(a_ref, b_ref, o_ref, acc_ref, *, apply_relu):
    @pl.when(pl.program_id(2) == 0)
    def _():
        acc_ref[...] = jnp.zeros_like(acc_ref)

    acc_ref[...] += jnp.dot(a_ref[...], b_ref[...],
                            preferred_element_type=jnp.float32)

    @pl.when(pl.program_id(2) == pl.num_programs(2) - 1)
    def _():
        res = acc_ref[...]
        if apply_relu:
            res = jnp.maximum(res, 0.0)
        o_ref[...] = res.astype(o_ref.dtype)


def pallas_matmul(a, b, *, apply_relu=False, tm=256, tn=256, tk=512):
    """C = a @ b (optionally fused ReLU). Inputs must be padded lane-dense."""
    M, K = a.shape
    K2, N = b.shape
    assert K == K2, (a.shape, b.shape)
    tm, tn, tk = min(tm, M), min(tn, N), min(tk, K)
    assert M % tm == 0 and N % tn == 0 and K % tk == 0, (a.shape, b.shape)

    return pl.pallas_call(
        functools.partial(_matmul_kernel, apply_relu=apply_relu),
        out_shape=jax.ShapeDtypeStruct((M, N), jnp.float32),
        grid_spec=pltpu.PrefetchScalarGridSpec(
            num_scalar_prefetch=0,
            grid=(M // tm, N // tn, K // tk),
            in_specs=[
                pl.BlockSpec((tm, tk), lambda i, j, k: (i, k)),
                pl.BlockSpec((tk, tn), lambda i, j, k: (k, j)),
            ],
            out_specs=pl.BlockSpec((tm, tn), lambda i, j, k: (i, j)),
            scratch_shapes=[pltpu.VMEM((tm, tn), jnp.float32)],
        ),
        compiler_params=pltpu.CompilerParams(
            dimension_semantics=("parallel", "parallel", "arbitrary"),
            vmem_limit_bytes=_VMEM_LIMIT_BYTES,
        ),
    )(a, b)


def _tiled_forward(adj_p, w1_p, wmid_p, w2_p, *, compute_dtype):
    cd = compute_dtype
    nmid = 0 if wmid_p is None else wmid_p.shape[0]
    out = pallas_matmul(adj_p, w1_p, apply_relu=True)
    for l in range(nmid):
        pre = pallas_matmul(out.astype(cd), wmid_p[l], apply_relu=False)
        out = pallas_matmul(adj_p, pre.astype(cd), apply_relu=True)
    pre = pallas_matmul(out.astype(cd), w2_p, apply_relu=False)
    return pallas_matmul(adj_p, pre.astype(cd), apply_relu=False)


# --------------------------------------------------------------------------
# Public forward pass.
# --------------------------------------------------------------------------
def init_gcn_params(key, input_dim, nlayers, nhidden, nclass):
    """Deterministic stand-in for the torch.randn parameter init."""
    keys = jax.random.split(key, max(nlayers, 2))
    return {
        "W1": jax.random.normal(keys[0], (input_dim, nhidden), jnp.float32),
        "W2": jax.random.normal(keys[1], (nhidden, nclass), jnp.float32),
        "Wmid": [jax.random.normal(keys[2 + i], (nhidden, nhidden), jnp.float32)
                 for i in range(nlayers - 2)],
    }


def _gcn_forward_impl(params, x, adj, compute_dtype=jnp.float32,
                      force_tiled=False):
    del x  # layer1 is featureless: x is ignored, matching the PyTorch module.
    n = adj.shape[0]
    nhidden = params["W1"].shape[1]
    nclass = params["W2"].shape[1]
    nmid = len(params["Wmid"])
    assert params["W1"].shape[0] == n, "featureless layer1 needs input_dim == #nodes"

    # Zero-pad every dim to a multiple of 128: lane-dense stores, full MXU tiles.
    np_ = _round_up(n, _LANE)
    hp = _round_up(nhidden, _LANE)
    cp = _round_up(nclass, _LANE)
    cd = compute_dtype

    adj_p = _pad_to(adj, (np_, np_)).astype(cd)
    w1_p = _pad_to(params["W1"], (np_, hp)).astype(cd)
    w2_p = _pad_to(params["W2"], (hp, cp)).astype(cd)
    wmid_p = (jnp.stack([_pad_to(w, (hp, hp)) for w in params["Wmid"]]).astype(cd)
              if nmid else None)

    itemsize = jnp.dtype(cd).itemsize
    if (not force_tiled and
            _fused_vmem_bytes(np_, hp, cp, nmid, itemsize) <= _FUSE_VMEM_BUDGET):
        out_p = _fused_forward(adj_p, w1_p, wmid_p, w2_p)
    else:
        out_p = _tiled_forward(adj_p, w1_p, wmid_p, w2_p, compute_dtype=cd)
    return out_p[:n, :nclass]


gcn_forward = jax.jit(_gcn_forward_impl,
                      static_argnames=("compute_dtype", "force_tiled"))


if __name__ == "__main__":
    # Small shapes: N nodes == input_dim (Text-GCN featureless convention).
    N = 64
    input_dim = N
    nlayers = 3       # layer1 + 1 middle conv + layer2
    nhidden = 32
    nclass = 16

    key = jax.random.PRNGKey(0)
    kp, kx, ka = jax.random.split(key, 3)
    params = init_gcn_params(kp, input_dim, nlayers, nhidden, nclass)

    # x is part of the module signature but ignored (featureless layer1).
    x = jax.random.normal(kx, (N, input_dim), jnp.float32)
    # Symmetric, row-normalized dense adjacency.
    a = jax.random.uniform(ka, (N, N), jnp.float32)
    adj = (a + a.T) * 0.5
    adj = adj / jnp.sum(adj, axis=1, keepdims=True)

    # Fused single-kernel path (everything VMEM-resident, one launch).
    out = jax.block_until_ready(gcn_forward(params, x, adj))
    assert out.shape == (N, nclass), out.shape

    # K-tiled fallback path (large-graph design), exercised for correctness.
    out_tiled = jax.block_until_ready(gcn_forward(params, x, adj, force_tiled=True))
    assert out_tiled.shape == (N, nclass), out_tiled.shape

    # Plain-JAX reference (same semantics as the PyTorch module), high precision.
    hi = jax.lax.Precision.HIGHEST
    ref = jnp.maximum(jnp.dot(adj, params["W1"], precision=hi), 0.0)
    for w in params["Wmid"]:
        ref = jnp.maximum(
            jnp.dot(adj, jnp.dot(ref, w, precision=hi), precision=hi), 0.0)
    ref = jnp.dot(adj, jnp.dot(ref, params["W2"], precision=hi), precision=hi)

    assert jnp.allclose(out, ref, atol=2e-3, rtol=2e-2), \
        float(jnp.max(jnp.abs(out - ref)))
    assert jnp.allclose(out_tiled, ref, atol=2e-3, rtol=2e-2), \
        float(jnp.max(jnp.abs(out_tiled - ref)))

    print("KERNEL_OK")
</pallas_src>

<mosaic_0001>
module attributes {stable_mosaic.version = 11 : i64} {
  func.func @_fused_gcn_kernel(%arg0: i32, %arg1: memref<128x128xf32, #tpu.memory_space<vmem>>, %arg2: memref<128x128xf32, #tpu.memory_space<vmem>>, %arg3: memref<1x128x128xf32, #tpu.memory_space<vmem>>, %arg4: memref<128x128xf32, #tpu.memory_space<vmem>>, %arg5: memref<128x128xf32, #tpu.memory_space<vmem>>) attributes {dimension_semantics = [#tpu.dimension_semantics<arbitrary>], iteration_bounds = array<i64: 1>, scalar_prefetch = 0 : i64, scratch_operands = 0 : i64, tpu.core_type = #tpu.core_type<tc>, window_params = [{pipeline_mode = #tpu.pipeline_mode<synchronous>, transform_indices = @transform_0, window_bounds = array<i64: 128, 128>}, {pipeline_mode = #tpu.pipeline_mode<synchronous>, transform_indices = @transform_1, window_bounds = array<i64: 128, 128>}, {pipeline_mode = #tpu.pipeline_mode<synchronous>, transform_indices = @transform_2, window_bounds = array<i64: 1, 128, 128>}, {pipeline_mode = #tpu.pipeline_mode<synchronous>, transform_indices = @transform_3, window_bounds = array<i64: 128, 128>}, {pipeline_mode = #tpu.pipeline_mode<synchronous>, transform_indices = @transform_4, window_bounds = array<i64: 128, 128>}]} {
    %c0 = arith.constant 0 : index
    %c0_0 = arith.constant 0 : index
    %0 = vector.load %arg1[%c0, %c0_0] : memref<128x128xf32, #tpu.memory_space<vmem>>, vector<128x128xf32>
    %c0_1 = arith.constant 0 : index
    %c0_2 = arith.constant 0 : index
    %1 = vector.load %arg2[%c0_1, %c0_2] : memref<128x128xf32, #tpu.memory_space<vmem>>, vector<128x128xf32>
    %cst = arith.constant dense<0.000000e+00> : vector<128x128xf32>
    %2 = tpu.matmul %0, %1, %cst {dimension_numbers = #tpu.dot_dimension_numbers<[1], [0], [0], [1], [0, 0, 1, 1], [], []>} : vector<128x128xf32>, vector<128x128xf32>, vector<128x128xf32> -> vector<128x128xf32>
    %cst_3 = arith.constant 0.000000e+00 : f32
    %3 = vector.broadcast %cst_3 : f32 to vector<128x128xf32>
    %4 = arith.maximumf %2, %3 : vector<128x128xf32>
    %c0_4 = arith.constant 0 : index
    %c0_5 = arith.constant 0 : index
    %c0_6 = arith.constant 0 : index
    %5 = vector.load %arg3[%c0_4, %c0_5, %c0_6] : memref<1x128x128xf32, #tpu.memory_space<vmem>>, vector<1x128x128xf32>
    %6 = vector.shape_cast %5 : vector<1x128x128xf32> to vector<128x128xf32>
    %cst_7 = arith.constant dense<0.000000e+00> : vector<128x128xf32>
    %7 = tpu.matmul %4, %6, %cst_7 {dimension_numbers = #tpu.dot_dimension_numbers<[1], [0], [0], [1], [0, 0, 1, 1], [], []>} : vector<128x128xf32>, vector<128x128xf32>, vector<128x128xf32> -> vector<128x128xf32>
    %cst_8 = arith.constant dense<0.000000e+00> : vector<128x128xf32>
    %8 = tpu.matmul %0, %7, %cst_8 {dimension_numbers = #tpu.dot_dimension_numbers<[1], [0], [0], [1], [0, 0, 1, 1], [], []>} : vector<128x128xf32>, vector<128x128xf32>, vector<128x128xf32> -> vector<128x128xf32>
    %cst_9 = arith.constant 0.000000e+00 : f32
    %9 = vector.broadcast %cst_9 : f32 to vector<128x128xf32>
    %10 = arith.maximumf %8, %9 : vector<128x128xf32>
    %c0_10 = arith.constant 0 : index
    %c0_11 = arith.constant 0 : index
    %11 = vector.load %arg4[%c0_10, %c0_11] : memref<128x128xf32, #tpu.memory_space<vmem>>, vector<128x128xf32>
    %cst_12 = arith.constant dense<0.000000e+00> : vector<128x128xf32>
    %12 = tpu.matmul %10, %11, %cst_12 {dimension_numbers = #tpu.dot_dimension_numbers<[1], [0], [0], [1], [0, 0, 1, 1], [], []>} : vector<128x128xf32>, vector<128x128xf32>, vector<128x128xf32> -> vector<128x128xf32>
    %cst_13 = arith.constant dense<0.000000e+00> : vector<128x128xf32>
    %13 = tpu.matmul %0, %12, %cst_13 {dimension_numbers = #tpu.dot_dimension_numbers<[1], [0], [0], [1], [0, 0, 1, 1], [], []>} : vector<128x128xf32>, vector<128x128xf32>, vector<128x128xf32> -> vector<128x128xf32>
    %c0_14 = arith.constant 0 : index
    %c0_15 = arith.constant 0 : index
    %14 = vector.load %arg5[%c0_14, %c0_15] : memref<128x128xf32, #tpu.memory_space<vmem>>, vector<128x128xf32>
    tpu.vector_store %arg5[%c0_14, %c0_15], %13 {strides = array<i32>} : memref<128x128xf32, #tpu.memory_space<vmem>>, vector<128x128xf32>,
    return
  }
  func.func @transform_0(%arg0: i32) -> (i32, i32) {
    %c0_i32 = arith.constant 0 : i32
    %c0_i32_0 = arith.constant 0 : i32
    %c0_i32_1 = arith.constant 0 : i32
    return %c0_i32, %c0_i32_0 : i32, i32
  }
  func.func @transform_1(%arg0: i32) -> (i32, i32) {
    %c0_i32 = arith.constant 0 : i32
    %c0_i32_0 = arith.constant 0 : i32
    %c0_i32_1 = arith.constant 0 : i32
    return %c0_i32, %c0_i32_0 : i32, i32
  }
  func.func @transform_2(%arg0: i32) -> (i32, i32, i32) {
    %c0_i32 = arith.constant 0 : i32
    %c0_i32_0 = arith.constant 0 : i32
    %c0_i32_1 = arith.constant 0 : i32
    %c0_i32_2 = arith.constant 0 : i32
    return %c0_i32, %c0_i32_0, %c0_i32_1 : i32, i32, i32
  }
  func.func @transform_3(%arg0: i32) -> (i32, i32) {
    %c0_i32 = arith.constant 0 : i32
    %c0_i32_0 = arith.constant 0 : i32
    %c0_i32_1 = arith.constant 0 : i32
    return %c0_i32, %c0_i32_0 : i32, i32
  }
  func.func @transform_4(%arg0: i32) -> (i32, i32) {
    %c0_i32 = arith.constant 0 : i32
    %c0_i32_0 = arith.constant 0 : i32
    %c0_i32_1 = arith.constant 0 : i32
    return %c0_i32, %c0_i32_0 : i32, i32
  }
}

</mosaic_0001>

<llo_original>
// kernel: _gcn_forward_impl.1
$region0: #{_gcn_forward_impl.1}
  #allocation0 [shape = 'u32[]', space=smem, size = 0x4, offset = 0x4, fixed_abs, tag = 'smem constant byte address 0x4 - core index']
  #allocation1 [shape = 'u32[72,128]{1,0:T(1,128)}', space=vmem, size = 0x9000, scoped, tag = 'internal scratch']
  %s0 = inlined_call_operand.vmem [shape: f32[128,128], index: 0, kind: input, shape index: {}]
  %s1 = inlined_call_operand.vmem [shape: f32[128,128], index: 1, kind: input, shape index: {}]
  %s2 = inlined_call_operand.vmem [shape: f32[1,128,128], index: 2, kind: input, shape index: {}]
  %s3 = inlined_call_operand.vmem [shape: f32[128,128], index: 3, kind: input, shape index: {}]
  %s4 = inlined_call_operand.vmem [shape: f32[128,128], index: 4, kind: output, shape index: {}]
  %s5 = sld [smem:[#allocation0]]
  $region26: #{_gcn_forward_impl.1} parent=0
    _
  %s7 = ssub.s32 1, %s5
  %s8 = scalar_select 0, %s7, %s5
  // Predicated region
  $region2: #{_gcn_forward_impl.1} parent=0 // pred_check
    _
  $region3: #{_gcn_forward_impl.1} parent=0 // pred_check_branch
    %10 = sbr.rel (0) target = $region5
  $region4: #{_gcn_forward_impl.1} parent=0 // pred_region
    _
  $region5: #{_gcn_forward_impl.1} parent=0 // pred_fallthru
    _
  // Predicated region
  $region6: #{_gcn_forward_impl.1} parent=0 // pred_check
    _
  $region7: #{_gcn_forward_impl.1} parent=0 // pred_check_branch
    %12 = sbr.rel (0) target = $region9
  $region8: #{_gcn_forward_impl.1} parent=0 // pred_region
    _
  $region9: #{_gcn_forward_impl.1} parent=0 // pred_fallthru
    _
  // Predicated region
  $region10: #{_gcn_forward_impl.1} parent=0 // pred_check
    _
  $region11: #{_gcn_forward_impl.1} parent=0 // pred_check_branch
    %14 = sbr.rel (0) target = $region13
  $region12: #{_gcn_forward_impl.1} parent=0 // pred_region
    _
  $region13: #{_gcn_forward_impl.1} parent=0 // pred_fallthru
    _
  // Predicated region
  $region14: #{_gcn_forward_impl.1} parent=0 // pred_check
    _
  $region15: #{_gcn_forward_impl.1} parent=0 // pred_check_branch
    %16 = sbr.rel (0) target = $region17
  $region16: #{_gcn_forward_impl.1} parent=0 // pred_region
    _
  $region17: #{_gcn_forward_impl.1} parent=0 // pred_fallthru
    _
  %v17 = vld [vmem:[%s0] sm:$0xff]
  %v18 = vld [vmem:[%s0 + $0x8] sm:$0xff]
  %v19 = vld [vmem:[%s0 + $0x10] sm:$0xff]
  %v20 = vld [vmem:[%s0 + $0x18] sm:$0xff]
  %v21 = vld [vmem:[%s0 + $0x20] sm:$0xff]
  %v22 = vld [vmem:[%s0 + $0x28] sm:$0xff]
  %v23 = vld [vmem:[%s0 + $0x30] sm:$0xff]
  %v24 = vld [vmem:[%s0 + $0x38] sm:$0xff]
  %v25 = vld [vmem:[%s0 + $0x40] sm:$0xff]
  %v26 = vld [vmem:[%s0 + $0x48] sm:$0xff]
  %v27 = vld [vmem:[%s0 + $0x50] sm:$0xff]
  %v28 = vld [vmem:[%s0 + $0x58] sm:$0xff]
  %v29 = vld [vmem:[%s0 + $0x60] sm:$0xff]
  %v30 = vld [vmem:[%s0 + $0x68] sm:$0xff]
  %v31 = vld [vmem:[%s0 + $0x70] sm:$0xff]
  %v32 = vld [vmem:[%s0 + $0x78] sm:$0xff]
  %v33 = vld [vmem:[%s1] sm:$0xff]
  %v34 = vld [vmem:[%s1 + $0x8] sm:$0xff]
  %v35 = vld [vmem:[%s1 + $0x10] sm:$0xff]
  %v36 = vld [vmem:[%s1 + $0x18] sm:$0xff]
  %v37 = vld [vmem:[%s1 + $0x20] sm:$0xff]
  %v38 = vld [vmem:[%s1 + $0x28] sm:$0xff]
  %v39 = vld [vmem:[%s1 + $0x30] sm:$0xff]
  %v40 = vld [vmem:[%s1 + $0x38] sm:$0xff]
  %v41 = vld [vmem:[%s1 + $0x40] sm:$0xff]
  %v42 = vld [vmem:[%s1 + $0x48] sm:$0xff]
  %v43 = vld [vmem:[%s1 + $0x50] sm:$0xff]
  %v44 = vld [vmem:[%s1 + $0x58] sm:$0xff]
  %v45 = vld [vmem:[%s1 + $0x60] sm:$0xff]
  %v46 = vld [vmem:[%s1 + $0x68] sm:$0xff]
  %v47 = vld [vmem:[%s1 + $0x70] sm:$0xff]
  %v48 = vld [vmem:[%s1 + $0x78] sm:$0xff]
  %49 = vmatpush.msra.mxu0 %v48
  %50 = vmatpush.msra.mxu0 %v47
  %51 = vmatpush.msra.mxu0 %v46
  %52 = vmatpush.msra.mxu0 %v45
  %53 = vmatpush.msra.mxu0 %v44
  %54 = vmatpush.msra.mxu0 %v43
  %55 = vmatpush.msra.mxu0 %v42
  %56 = vmatpush.msra.mxu0 %v41
  %57 = vmatpush.msra.mxu0 %v40
  %58 = vmatpush.msra.mxu0 %v39
  %59 = vmatpush.msra.mxu0 %v38
  %60 = vmatpush.msra.mxu0 %v37
  %61 = vmatpush.msra.mxu0 %v36
  %62 = vmatpush.msra.mxu0 %v35
  %63 = vmatpush.msra.mxu0 %v34
  %64 = vmatpush.msra.mxu0 %v33
  %65 = vmatmul.f32.gmra.mxu0 %v17
  %v66 = vpop.f32.mrf.mxu0
  %v67 = vadd.f32 0.0, %v66
  %68 = vmatmul.f32.gmra.mxu0 %v18
  %v69 = vpop.f32.mrf.mxu0
  %v70 = vadd.f32 0.0, %v69
  %71 = vmatmul.f32.gmra.mxu0 %v19
  %v72 = vpop.f32.mrf.mxu0
  %v73 = vadd.f32 0.0, %v72
  %74 = vmatmul.f32.gmra.mxu0 %v20
  %v75 = vpop.f32.mrf.mxu0
  %v76 = vadd.f32 0.0, %v75
  %77 = vmatmul.f32.gmra.mxu0 %v21
  %v78 = vpop.f32.mrf.mxu0
  %v79 = vadd.f32 0.0, %v78
  %80 = vmatmul.f32.gmra.mxu0 %v22
  %v81 = vpop.f32.mrf.mxu0
  %v82 = vadd.f32 0.0, %v81
  %83 = vmatmul.f32.gmra.mxu0 %v23
  %v84 = vpop.f32.mrf.mxu0
  %v85 = vadd.f32 0.0, %v84
  %86 = vmatmul.f32.gmra.mxu0 %v24
  %v87 = vpop.f32.mrf.mxu0
  %v88 = vadd.f32 0.0, %v87
  %89 = vmatmul.f32.gmra.mxu0 %v25
  %v90 = vpop.f32.mrf.mxu0
  %v91 = vadd.f32 0.0, %v90
  %92 = vmatmul.f32.gmra.mxu0 %v26
  %v93 = vpop.f32.mrf.mxu0
  %v94 = vadd.f32 0.0, %v93
  %95 = vmatmul.f32.gmra.mxu0 %v27
  %v96 = vpop.f32.mrf.mxu0
  %v97 = vadd.f32 0.0, %v96
  %98 = vmatmul.f32.gmra.mxu0 %v28
  %v99 = vpop.f32.mrf.mxu0
  %v100 = vadd.f32 0.0, %v99
  %101 = vmatmul.f32.gmra.mxu0 %v29
  %v102 = vpop.f32.mrf.mxu0
  %v103 = vadd.f32 0.0, %v102
  %104 = vmatmul.f32.gmra.mxu0 %v30
  %v105 = vpop.f32.mrf.mxu0
  %v106 = vadd.f32 0.0, %v105
  %107 = vmatmul.f32.gmra.mxu0 %v31
  %v108 = vpop.f32.mrf.mxu0
  %v109 = vadd.f32 0.0, %v108
  %110 = vmatmul.f32.gmra.mxu0 %v32
  %v111 = vpop.f32.mrf.mxu0
  %v112 = vadd.f32 0.0, %v111
  %113 = vdwg.mxu0
  %v114 = vmax.f32 %v67, 0.0
  %v115 = vmax.f32 %v70, 0.0
  %v116 = vmax.f32 %v73, 0.0
  %v117 = vmax.f32 %v76, 0.0
  %v118 = vmax.f32 %v79, 0.0
  %v119 = vmax.f32 %v82, 0.0
  %v120 = vmax.f32 %v85, 0.0
  %v121 = vmax.f32 %v88, 0.0
  %v122 = vmax.f32 %v91, 0.0
  %v123 = vmax.f32 %v94, 0.0
  %v124 = vmax.f32 %v97, 0.0
  %v125 = vmax.f32 %v100, 0.0
  %v126 = vmax.f32 %v103, 0.0
  %v127 = vmax.f32 %v106, 0.0
  %v128 = vmax.f32 %v109, 0.0
  %v129 = vmax.f32 %v112, 0.0
  %v130 = vld [vmem:[%s2] sm:$0xff]
  %v131 = vld [vmem:[%s2 + $0x8] sm:$0xff]
  %v132 = vld [vmem:[%s2 + $0x10] sm:$0xff]
  %v133 = vld [vmem:[%s2 + $0x18] sm:$0xff]
  %v134 = vld [vmem:[%s2 + $0x20] sm:$0xff]
  %v135 = vld [vmem:[%s2 + $0x28] sm:$0xff]
  %v136 = vld [vmem:[%s2 + $0x30] sm:$0xff]
  %v137 = vld [vmem:[%s2 + $0x38] sm:$0xff]
  %v138 = vld [vmem:[%s2 + $0x40] sm:$0xff]
  %v139 = vld [vmem:[%s2 + $0x48] sm:$0xff]
  %v140 = vld [vmem:[%s2 + $0x50] sm:$0xff]
  %v141 = vld [vmem:[%s2 + $0x58] sm:$0xff]
  %v142 = vld [vmem:[%s2 + $0x60] sm:$0xff]
  %v143 = vld [vmem:[%s2 + $0x68] sm:$0xff]
  %v144 = vld [vmem:[%s2 + $0x70] sm:$0xff]
  %v145 = vld [vmem:[%s2 + $0x78] sm:$0xff]
  %146 = vmatpush.msra.mxu0 %v145
  %147 = vmatpush.msra.mxu0 %v144
  %148 = vmatpush.msra.mxu0 %v143
  %149 = vmatpush.msra.mxu0 %v142
  %150 = vmatpush.msra.mxu0 %v141
  %151 = vmatpush.msra.mxu0 %v140
  %152 = vmatpush.msra.mxu0 %v139
  %153 = vmatpush.msra.mxu0 %v138
  %154 = vmatpush.msra.mxu0 %v137
  %155 = vmatpush.msra.mxu0 %v136
  %156 = vmatpush.msra.mxu0 %v135
  %157 = vmatpush.msra.mxu0 %v134
  %158 = vmatpush.msra.mxu0 %v133
  %159 = vmatpush.msra.mxu0 %v132
  %160 = vmatpush.msra.mxu0 %v131
  %161 = vmatpush.msra.mxu0 %v130
  %162 = vmatmul.f32.gmra.mxu0 %v114
  %v163 = vpop.f32.mrf.mxu0
  %v164 = vadd.f32 0.0, %v163
  %165 = vmatmul.f32.gmra.mxu0 %v115
  %v166 = vpop.f32.mrf.mxu0
  %v167 = vadd.f32 0.0, %v166
  %168 = vmatmul.f32.gmra.mxu0 %v116
  %v169 = vpop.f32.mrf.mxu0
  %v170 = vadd.f32 0.0, %v169
  %171 = vmatmul.f32.gmra.mxu0 %v117
  %v172 = vpop.f32.mrf.mxu0
  %v173 = vadd.f32 0.0, %v172
  %174 = vmatmul.f32.gmra.mxu0 %v118
  %v175 = vpop.f32.mrf.mxu0
  %v176 = vadd.f32 0.0, %v175
  %177 = vmatmul.f32.gmra.mxu0 %v119
  %v178 = vpop.f32.mrf.mxu0
  %v179 = vadd.f32 0.0, %v178
  %180 = vmatmul.f32.gmra.mxu0 %v120
  %v181 = vpop.f32.mrf.mxu0
  %v182 = vadd.f32 0.0, %v181
  %183 = vmatmul.f32.gmra.mxu0 %v121
  %v184 = vpop.f32.mrf.mxu0
  %v185 = vadd.f32 0.0, %v184
  %186 = vmatmul.f32.gmra.mxu0 %v122
  %v187 = vpop.f32.mrf.mxu0
  %v188 = vadd.f32 0.0, %v187
  %189 = vmatmul.f32.gmra.mxu0 %v123
  %v190 = vpop.f32.mrf.mxu0
  %v191 = vadd.f32 0.0, %v190
  %192 = vmatmul.f32.gmra.mxu0 %v124
  %v193 = vpop.f32.mrf.mxu0
  %v194 = vadd.f32 0.0, %v193
  %195 = vmatmul.f32.gmra.mxu0 %v125
  %v196 = vpop.f32.mrf.mxu0
  %v197 = vadd.f32 0.0, %v196
  %198 = vmatmul.f32.gmra.mxu0 %v126
  %v199 = vpop.f32.mrf.mxu0
  %v200 = vadd.f32 0.0, %v199
  %201 = vmatmul.f32.gmra.mxu0 %v127
  %v202 = vpop.f32.mrf.mxu0
  %v203 = vadd.f32 0.0, %v202
  %204 = vmatmul.f32.gmra.mxu0 %v128
  %v205 = vpop.f32.mrf.mxu0
  %v206 = vadd.f32 0.0, %v205
  %207 = vmatmul.f32.gmra.mxu0 %v129
  %v208 = vpop.f32.mrf.mxu0
  %v209 = vadd.f32 0.0, %v208
  %210 = vdwg.mxu0
  %211 = vmatpush.msra.mxu0 %v209
  %212 = vmatpush.msra.mxu0 %v206
  %213 = vmatpush.msra.mxu0 %v203
  %214 = vmatpush.msra.mxu0 %v200
  %215 = vmatpush.msra.mxu0 %v197
  %216 = vmatpush.msra.mxu0 %v194
  %217 = vmatpush.msra.mxu0 %v191
  %218 = vmatpush.msra.mxu0 %v188
  %219 = vmatpush.msra.mxu0 %v185
  %220 = vmatpush.msra.mxu0 %v182
  %221 = vmatpush.msra.mxu0 %v179
  %222 = vmatpush.msra.mxu0 %v176
  %223 = vmatpush.msra.mxu0 %v173
  %224 = vmatpush.msra.mxu0 %v170
  %225 = vmatpush.msra.mxu0 %v167
  %226 = vmatpush.msra.mxu0 %v164
  %227 = vmatmul.f32.gmra.mxu0 %v17
  %v228 = vpop.f32.mrf.mxu0
  %v229 = vadd.f32 0.0, %v228
  %230 = vmatmul.f32.gmra.mxu0 %v18
  %v231 = vpop.f32.mrf.mxu0
  %v232 = vadd.f32 0.0, %v231
  %233 = vmatmul.f32.gmra.mxu0 %v19
  %v234 = vpop.f32.mrf.mxu0
  %v235 = vadd.f32 0.0, %v234
  %236 = vmatmul.f32.gmra.mxu0 %v20
  %v237 = vpop.f32.mrf.mxu0
  %v238 = vadd.f32 0.0, %v237
  %239 = vmatmul.f32.gmra.mxu0 %v21
  %v240 = vpop.f32.mrf.mxu0
  %v241 = vadd.f32 0.0, %v240
  %242 = vmatmul.f32.gmra.mxu0 %v22
  %v243 = vpop.f32.mrf.mxu0
  %v244 = vadd.f32 0.0, %v243
  %245 = vmatmul.f32.gmra.mxu0 %v23
  %v246 = vpop.f32.mrf.mxu0
  %v247 = vadd.f32 0.0, %v246
  %248 = vmatmul.f32.gmra.mxu0 %v24
  %v249 = vpop.f32.mrf.mxu0
  %v250 = vadd.f32 0.0, %v249
  %251 = vmatmul.f32.gmra.mxu0 %v25
  %v252 = vpop.f32.mrf.mxu0
  %v253 = vadd.f32 0.0, %v252
  %254 = vmatmul.f32.gmra.mxu0 %v26
  %v255 = vpop.f32.mrf.mxu0
  %v256 = vadd.f32 0.0, %v255
  %257 = vmatmul.f32.gmra.mxu0 %v27
  %v258 = vpop.f32.mrf.mxu0
  %v259 = vadd.f32 0.0, %v258
  %260 = vmatmul.f32.gmra.mxu0 %v28
  %v261 = vpop.f32.mrf.mxu0
  %v262 = vadd.f32 0.0, %v261
  %263 = vmatmul.f32.gmra.mxu0 %v29
  %v264 = vpop.f32.mrf.mxu0
  %v265 = vadd.f32 0.0, %v264
  %266 = vmatmul.f32.gmra.mxu0 %v30
  %v267 = vpop.f32.mrf.mxu0
  %v268 = vadd.f32 0.0, %v267
  %269 = vmatmul.f32.gmra.mxu0 %v31
  %v270 = vpop.f32.mrf.mxu0
  %v271 = vadd.f32 0.0, %v270
  %272 = vmatmul.f32.gmra.mxu0 %v32
  %v273 = vpop.f32.mrf.mxu0
  %v274 = vadd.f32 0.0, %v273
  %275 = vdwg.mxu0
  %v276 = vmax.f32 %v229, 0.0
  %v277 = vmax.f32 %v232, 0.0
  %v278 = vmax.f32 %v235, 0.0
  %v279 = vmax.f32 %v238, 0.0
  %v280 = vmax.f32 %v241, 0.0
  %v281 = vmax.f32 %v244, 0.0
  %v282 = vmax.f32 %v247, 0.0
  %v283 = vmax.f32 %v250, 0.0
  %v284 = vmax.f32 %v253, 0.0
  %v285 = vmax.f32 %v256, 0.0
  %v286 = vmax.f32 %v259, 0.0
  %v287 = vmax.f32 %v262, 0.0
  %v288 = vmax.f32 %v265, 0.0
  %v289 = vmax.f32 %v268, 0.0
  %v290 = vmax.f32 %v271, 0.0
  %v291 = vmax.f32 %v274, 0.0
  %v292 = vld [vmem:[%s3] sm:$0xff]
  %v293 = vld [vmem:[%s3 + $0x8] sm:$0xff]
  %v294 = vld [vmem:[%s3 + $0x10] sm:$0xff]
  %v295 = vld [vmem:[%s3 + $0x18] sm:$0xff]
  %v296 = vld [vmem:[%s3 + $0x20] sm:$0xff]
  %v297 = vld [vmem:[%s3 + $0x28] sm:$0xff]
  %v298 = vld [vmem:[%s3 + $0x30] sm:$0xff]
  %v299 = vld [vmem:[%s3 + $0x38] sm:$0xff]
  %v300 = vld [vmem:[%s3 + $0x40] sm:$0xff]
  %v301 = vld [vmem:[%s3 + $0x48] sm:$0xff]
  %v302 = vld [vmem:[%s3 + $0x50] sm:$0xff]
  %v303 = vld [vmem:[%s3 + $0x58] sm:$0xff]
  %v304 = vld [vmem:[%s3 + $0x60] sm:$0xff]
  %v305 = vld [vmem:[%s3 + $0x68] sm:$0xff]
  %v306 = vld [vmem:[%s3 + $0x70] sm:$0xff]
  %v307 = vld [vmem:[%s3 + $0x78] sm:$0xff]
  %308 = vmatpush.msra.mxu0 %v307
  %309 = vmatpush.msra.mxu0 %v306
  %310 = vmatpush.msra.mxu0 %v305
  %311 = vmatpush.msra.mxu0 %v304
  %312 = vmatpush.msra.mxu0 %v303
  %313 = vmatpush.msra.mxu0 %v302
  %314 = vmatpush.msra.mxu0 %v301
  %315 = vmatpush.msra.mxu0 %v300
  %316 = vmatpush.msra.mxu0 %v299
  %317 = vmatpush.msra.mxu0 %v298
  %318 = vmatpush.msra.mxu0 %v297
  %319 = vmatpush.msra.mxu0 %v296
  %320 = vmatpush.msra.mxu0 %v295
  %321 = vmatpush.msra.mxu0 %v294
  %322 = vmatpush.msra.mxu0 %v293
  %323 = vmatpush.msra.mxu0 %v292
  %324 = vmatmul.f32.gmra.mxu0 %v276
  %v325 = vpop.f32.mrf.mxu0
  %v326 = vadd.f32 0.0, %v325
  %327 = vmatmul.f32.gmra.mxu0 %v277
  %v328 = vpop.f32.mrf.mxu0
  %v329 = vadd.f32 0.0, %v328
  %330 = vmatmul.f32.gmra.mxu0 %v278
  %v331 = vpop.f32.mrf.mxu0
  %v332 = vadd.f32 0.0, %v331
  %333 = vmatmul.f32.gmra.mxu0 %v279
  %v334 = vpop.f32.mrf.mxu0
  %v335 = vadd.f32 0.0, %v334
  %336 = vmatmul.f32.gmra.mxu0 %v280
  %v337 = vpop.f32.mrf.mxu0
  %v338 = vadd.f32 0.0, %v337
  %339 = vmatmul.f32.gmra.mxu0 %v281
  %v340 = vpop.f32.mrf.mxu0
  %v341 = vadd.f32 0.0, %v340
  %342 = vmatmul.f32.gmra.mxu0 %v282
  %v343 = vpop.f32.mrf.mxu0
  %v344 = vadd.f32 0.0, %v343
  %345 = vmatmul.f32.gmra.mxu0 %v283
  %v346 = vpop.f32.mrf.mxu0
  %v347 = vadd.f32 0.0, %v346
  %348 = vmatmul.f32.gmra.mxu0 %v284
  %v349 = vpop.f32.mrf.mxu0
  %v350 = vadd.f32 0.0, %v349
  %351 = vmatmul.f32.gmra.mxu0 %v285
  %v352 = vpop.f32.mrf.mxu0
  %v353 = vadd.f32 0.0, %v352
  %354 = vmatmul.f32.gmra.mxu0 %v286
  %v355 = vpop.f32.mrf.mxu0
  %v356 = vadd.f32 0.0, %v355
  %357 = vmatmul.f32.gmra.mxu0 %v287
  %v358 = vpop.f32.mrf.mxu0
  %v359 = vadd.f32 0.0, %v358
  %360 = vmatmul.f32.gmra.mxu0 %v288
  %v361 = vpop.f32.mrf.mxu0
  %v362 = vadd.f32 0.0, %v361
  %363 = vmatmul.f32.gmra.mxu0 %v289
  %v364 = vpop.f32.mrf.mxu0
  %v365 = vadd.f32 0.0, %v364
  %366 = vmatmul.f32.gmra.mxu0 %v290
  %v367 = vpop.f32.mrf.mxu0
  %v368 = vadd.f32 0.0, %v367
  %369 = vmatmul.f32.gmra.mxu0 %v291
  %v370 = vpop.f32.mrf.mxu0
  %v371 = vadd.f32 0.0, %v370
  %372 = vdwg.mxu0
  %373 = vmatpush.msra.mxu0 %v371
  %374 = vmatpush.msra.mxu0 %v368
  %375 = vmatpush.msra.mxu0 %v365
  %376 = vmatpush.msra.mxu0 %v362
  %377 = vmatpush.msra.mxu0 %v359
  %378 = vmatpush.msra.mxu0 %v356
  %379 = vmatpush.msra.mxu0 %v353
  %380 = vmatpush.msra.mxu0 %v350
  %381 = vmatpush.msra.mxu0 %v347
  %382 = vmatpush.msra.mxu0 %v344
  %383 = vmatpush.msra.mxu0 %v341
  %384 = vmatpush.msra.mxu0 %v338
  %385 = vmatpush.msra.mxu0 %v335
  %386 = vmatpush.msra.mxu0 %v332
  %387 = vmatpush.msra.mxu0 %v329
  %388 = vmatpush.msra.mxu0 %v326
  %389 = vmatmul.f32.gmra.mxu0 %v17
  %v390 = vpop.f32.mrf.mxu0
  %v391 = vadd.f32 0.0, %v390
  %392 = vmatmul.f32.gmra.mxu0 %v18
  %v393 = vpop.f32.mrf.mxu0
  %v394 = vadd.f32 0.0, %v393
  %395 = vmatmul.f32.gmra.mxu0 %v19
  %v396 = vpop.f32.mrf.mxu0
  %v397 = vadd.f32 0.0, %v396
  %398 = vmatmul.f32.gmra.mxu0 %v20
  %v399 = vpop.f32.mrf.mxu0
  %v400 = vadd.f32 0.0, %v399
  %401 = vmatmul.f32.gmra.mxu0 %v21
  %v402 = vpop.f32.mrf.mxu0
  %v403 = vadd.f32 0.0, %v402
  %404 = vmatmul.f32.gmra.mxu0 %v22
  %v405 = vpop.f32.mrf.mxu0
  %v406 = vadd.f32 0.0, %v405
  %407 = vmatmul.f32.gmra.mxu0 %v23
  %v408 = vpop.f32.mrf.mxu0
  %v409 = vadd.f32 0.0, %v408
  %410 = vmatmul.f32.gmra.mxu0 %v24
  %v411 = vpop.f32.mrf.mxu0
  %v412 = vadd.f32 0.0, %v411
  %413 = vmatmul.f32.gmra.mxu0 %v25
  %v414 = vpop.f32.mrf.mxu0
  %v415 = vadd.f32 0.0, %v414
  %416 = vmatmul.f32.gmra.mxu0 %v26
  %v417 = vpop.f32.mrf.mxu0
  %v418 = vadd.f32 0.0, %v417
  %419 = vmatmul.f32.gmra.mxu0 %v27
  %v420 = vpop.f32.mrf.mxu0
  %v421 = vadd.f32 0.0, %v420
  %422 = vmatmul.f32.gmra.mxu0 %v28
  %v423 = vpop.f32.mrf.mxu0
  %v424 = vadd.f32 0.0, %v423
  %425 = vmatmul.f32.gmra.mxu0 %v29
  %v426 = vpop.f32.mrf.mxu0
  %v427 = vadd.f32 0.0, %v426
  %428 = vmatmul.f32.gmra.mxu0 %v30
  %v429 = vpop.f32.mrf.mxu0
  %v430 = vadd.f32 0.0, %v429
  %431 = vmatmul.f32.gmra.mxu0 %v31
  %v432 = vpop.f32.mrf.mxu0
  %v433 = vadd.f32 0.0, %v432
  %434 = vmatmul.f32.gmra.mxu0 %v32
  %v435 = vpop.f32.mrf.mxu0
  %v436 = vadd.f32 0.0, %v435
  %437 = vdwg.mxu0
  %438 = vst [vmem:[%s4] sm:$0xff] %v391
  %439 = vst [vmem:[%s4 + $0x8] sm:$0xff] %v394
  %440 = vst [vmem:[%s4 + $0x10] sm:$0xff] %v397
  %441 = vst [vmem:[%s4 + $0x18] sm:$0xff] %v400
  %442 = vst [vmem:[%s4 + $0x20] sm:$0xff] %v403
  %443 = vst [vmem:[%s4 + $0x28] sm:$0xff] %v406
  %444 = vst [vmem:[%s4 + $0x30] sm:$0xff] %v409
  %445 = vst [vmem:[%s4 + $0x38] sm:$0xff] %v412
  %446 = vst [vmem:[%s4 + $0x40] sm:$0xff] %v415
  %447 = vst [vmem:[%s4 + $0x48] sm:$0xff] %v418
  %448 = vst [vmem:[%s4 + $0x50] sm:$0xff] %v421
  %449 = vst [vmem:[%s4 + $0x58] sm:$0xff] %v424
  %450 = vst [vmem:[%s4 + $0x60] sm:$0xff] %v427
  %451 = vst [vmem:[%s4 + $0x68] sm:$0xff] %v430
  %452 = vst [vmem:[%s4 + $0x70] sm:$0xff] %v433
  %453 = vst [vmem:[%s4 + $0x78] sm:$0xff] %v436
  // Predicated region
  $region18: #{_gcn_forward_impl.1} parent=0 // pred_check
    _
  $region19: #{_gcn_forward_impl.1} parent=0 // pred_check_branch
    %455 = sbr.rel (0) target = $region21
  $region20: #{_gcn_forward_impl.1} parent=0 // pred_region
    _
  $region21: #{_gcn_forward_impl.1} parent=0 // pred_fallthru
    _
  // Predicated region
  $region22: #{_gcn_forward_impl.1} parent=0 // pred_check
    _
  $region23: #{_gcn_forward_impl.1} parent=0 // pred_check_branch
    %457 = sbr.rel (0) target = $region25
  $region24: #{_gcn_forward_impl.1} parent=0 // pred_region
    _
  $region25: #{_gcn_forward_impl.1} parent=0 // pred_fallthru
    _

</llo_original>
